<compile_context>
chip_gen: v6e
topology: v6e:2x2x1
jax: 0.10.0
libtpu: 0.0.40
codegen_flags: <defaults>
</compile_context>

<pallas_src>
import jax
import jax.numpy as jnp
from jax.experimental import pallas as pl
from jax.experimental.pallas import tpu as pltpu

LANE = 128  # TPU lane width


def _round_up(n, m):
    return ((n + m - 1) // m) * m


def policy_kernel(x_ref, w1_ref, b1_ref, w2_ref, b2_ref, o_ref):
    # hidden = relu(x @ W1 + b1)
    x = x_ref[...]                                                   # (TM, obs_n)
    h = jnp.dot(x, w1_ref[...], preferred_element_type=jnp.float32) + b1_ref[...]
    h = jnp.maximum(h, 0.0)                                          # ReLU

    # logits = hidden @ W2 + b2   (no padded action columns)
    logits = jnp.dot(h, w2_ref[...], preferred_element_type=jnp.float32) + b2_ref[...]

    # Per-row softmax over the action (lane) axis.
    m = jnp.max(logits, axis=-1, keepdims=True)
    e = jnp.exp(logits - m)
    denom = jnp.sum(e, axis=-1, keepdims=True)
    # approx reciprocal runs on the otherwise-idle EUP slot; one Newton step
    # (r * (2 - d*r)) restores full f32 accuracy at trivial VALU cost.
    r = pl.reciprocal(denom, approx=True)
    r = r * (2.0 - denom * r)
    o_ref[...] = e * r


def prepare_params(w1, b1, w2, b2):
    """One-time (per weight update) packing of parameters for the kernel.

    Only the hidden dim is zero-padded to a lane multiple (exact zeros: padded
    hidden units have zero weights/bias -> relu(0)=0 -> contribute nothing to
    the second matmul).  obs_n and act_n are left unpadded.
    """
    obs_n, hidden = w1.shape
    act_n = w2.shape[1]
    hid_p = _round_up(hidden, LANE)
    w1p = jnp.zeros((obs_n, hid_p), jnp.float32).at[:, :hidden].set(w1)
    b1p = jnp.zeros((1, hid_p), jnp.float32).at[:, :hidden].set(b1.reshape(1, -1))
    w2p = jnp.zeros((hid_p, act_n), jnp.float32).at[:hidden, :].set(w2)
    b2p = b2.reshape(1, act_n).astype(jnp.float32)
    return w1p, b1p, w2p, b2p


def _choose_tm(batch, desired=512):
    """Batch tile: as large as `desired` but keeping >=2 grid steps when B allows
    it (v7x megacore), always a multiple of 8, and tiny for single-sample calls."""
    tm = min(desired, _round_up(pl.cdiv(batch, 2), 8))
    return max(tm, 8)


def policy_forward_batched(x, params, *, tm=None):
    """x: (B, obs_n) f32, params = prepare_params(...) -> (B, act_n) probabilities.

    Equivalent to applying the PyTorch `Policy` module independently to each row.
    """
    w1p, b1p, w2p, b2p = params
    B, obs_n = x.shape
    hid_p = w1p.shape[1]
    act_n = w2p.shape[1]

    if tm is None:
        tm = _choose_tm(B)
    b_p = _round_up(B, tm)
    xp = x.astype(jnp.float32)
    if b_p != B:
        xp = jnp.pad(xp, ((0, b_p - B), (0, 0)))   # zero rows, sliced off below

    out = pl.pallas_call(
        policy_kernel,
        out_shape=jax.ShapeDtypeStruct((b_p, act_n), jnp.float32),
        grid=(b_p // tm,),
        in_specs=[
            pl.BlockSpec((tm, obs_n), lambda i: (i, 0)),      # x: tiled over batch
            pl.BlockSpec((obs_n, hid_p), lambda i: (0, 0)),   # W1: VMEM-resident
            pl.BlockSpec((1, hid_p), lambda i: (0, 0)),       # b1: resident
            pl.BlockSpec((hid_p, act_n), lambda i: (0, 0)),   # W2: resident
            pl.BlockSpec((1, act_n), lambda i: (0, 0)),       # b2: resident
        ],
        out_specs=pl.BlockSpec((tm, act_n), lambda i: (i, 0)),
        compiler_params=pltpu.CompilerParams(
            dimension_semantics=("parallel",)),
    )(xp, w1p, b1p, w2p, b2p)

    return out if b_p == B else out[:B]


def policy_forward(x, params):
    """Exact single-sample semantics of the PyTorch module:
    x: (obs_n,) -> (act_n,) probabilities (Softmax(dim=0) of the 1-D output)."""
    return policy_forward_batched(x.reshape(1, -1), params, tm=8)[0]


def init_params(key, obs_n, hidden, act_n):
    """Deterministic PyTorch-style uniform init: U(-1/sqrt(fan_in), 1/sqrt(fan_in))."""
    k1, k2, k3, k4 = jax.random.split(key, 4)
    bound1 = 1.0 / jnp.sqrt(jnp.float32(obs_n))
    bound2 = 1.0 / jnp.sqrt(jnp.float32(hidden))
    w1 = jax.random.uniform(k1, (obs_n, hidden), jnp.float32, -bound1, bound1)
    b1 = jax.random.uniform(k2, (hidden,), jnp.float32, -bound1, bound1)
    w2 = jax.random.uniform(k3, (hidden, act_n), jnp.float32, -bound2, bound2)
    b2 = jax.random.uniform(k4, (act_n,), jnp.float32, -bound2, bound2)
    return w1, b1, w2, b2


if __name__ == "__main__":
    # Sizes consistent with the module: observation_space.n = 16,
    # hidden_size = 128 (module default), action_space.n = 8.
    OBS_N, HIDDEN, ACT_N = 16, 128, 8
    BATCH = 200  # deliberately not a multiple of the batch tile

    key = jax.random.PRNGKey(0)
    kx, kp = jax.random.split(key)
    xb = jax.random.normal(kx, (BATCH, OBS_N), jnp.float32)
    w1, b1, w2, b2 = init_params(kp, OBS_N, HIDDEN, ACT_N)

    # Hoisted out of the per-call path (done once per weight update).
    params = prepare_params(w1, b1, w2, b2)

    probs = policy_forward_batched(xb, params)
    probs = jax.block_until_ready(probs)

    # Pure-JAX reference (the PyTorch module applied per-row).
    h_ref = jnp.maximum(xb @ w1 + b1, 0.0)
    logits_ref = h_ref @ w2 + b2
    probs_ref = jax.nn.softmax(logits_ref, axis=-1)

    assert probs.shape == (BATCH, ACT_N)
    assert jnp.allclose(jnp.sum(probs, axis=-1), 1.0, atol=1e-4)
    assert jnp.allclose(probs, probs_ref, atol=1e-4)

    # Single-sample path (exact original-module semantics: softmax over dim=0 of
    # the 1-D output vector), using the small tm=8 tile.
    p1 = jax.block_until_ready(policy_forward(xb[0], params))
    p1_ref = jax.nn.softmax(jnp.maximum(xb[0] @ w1 + b1, 0.0) @ w2 + b2, axis=0)
    assert p1.shape == (ACT_N,)
    assert jnp.allclose(p1, p1_ref, atol=1e-4)

    print("KERNEL_OK")
</pallas_src>

<mosaic_0001>
module attributes {stable_mosaic.version = 11 : i64} {
  func.func @policy_kernel(%arg0: i32, %arg1: memref<104x16xf32, #tpu.memory_space<vmem>>, %arg2: memref<16x128xf32, #tpu.memory_space<vmem>>, %arg3: memref<1x128xf32, #tpu.memory_space<vmem>>, %arg4: memref<128x8xf32, #tpu.memory_space<vmem>>, %arg5: memref<1x8xf32, #tpu.memory_space<vmem>>, %arg6: memref<104x8xf32, #tpu.memory_space<vmem>>) attributes {dimension_semantics = [#tpu.dimension_semantics<parallel>], iteration_bounds = array<i64: 2>, scalar_prefetch = 0 : i64, scratch_operands = 0 : i64, tpu.core_type = #tpu.core_type<tc>, window_params = [{transform_indices = @transform_0, window_bounds = array<i64: 104, 16>}, {pipeline_mode = #tpu.pipeline_mode<synchronous>, transform_indices = @transform_1, window_bounds = array<i64: 16, 128>}, {pipeline_mode = #tpu.pipeline_mode<synchronous>, transform_indices = @transform_2, window_bounds = array<i64: 1, 128>}, {pipeline_mode = #tpu.pipeline_mode<synchronous>, transform_indices = @transform_3, window_bounds = array<i64: 128, 8>}, {pipeline_mode = #tpu.pipeline_mode<synchronous>, transform_indices = @transform_4, window_bounds = array<i64: 1, 8>}, {transform_indices = @transform_5, window_bounds = array<i64: 104, 8>}]} {
    %c0 = arith.constant 0 : index
    %c0_0 = arith.constant 0 : index
    %0 = vector.load %arg1[%c0, %c0_0] : memref<104x16xf32, #tpu.memory_space<vmem>>, vector<104x16xf32>
    %c0_1 = arith.constant 0 : index
    %c0_2 = arith.constant 0 : index
    %1 = vector.load %arg2[%c0_1, %c0_2] : memref<16x128xf32, #tpu.memory_space<vmem>>, vector<16x128xf32>
    %cst = arith.constant dense<0.000000e+00> : vector<104x128xf32>
    %2 = tpu.matmul %0, %1, %cst {dimension_numbers = #tpu.dot_dimension_numbers<[1], [0], [0], [1], [0, 0, 1, 1], [], []>} : vector<104x16xf32>, vector<16x128xf32>, vector<104x128xf32> -> vector<104x128xf32>
    %c0_3 = arith.constant 0 : index
    %c0_4 = arith.constant 0 : index
    %3 = vector.load %arg3[%c0_3, %c0_4] : memref<1x128xf32, #tpu.memory_space<vmem>>, vector<1x128xf32>
    %4 = vector.broadcast %3 : vector<1x128xf32> to vector<104x128xf32>
    %5 = arith.addf %2, %4 : vector<104x128xf32>
    %cst_5 = arith.constant 0.000000e+00 : f32
    %6 = vector.broadcast %cst_5 : f32 to vector<104x128xf32>
    %7 = arith.maximumf %5, %6 : vector<104x128xf32>
    %c0_6 = arith.constant 0 : index
    %c0_7 = arith.constant 0 : index
    %8 = vector.load %arg4[%c0_6, %c0_7] : memref<128x8xf32, #tpu.memory_space<vmem>>, vector<128x8xf32>
    %cst_8 = arith.constant dense<0.000000e+00> : vector<104x8xf32>
    %9 = tpu.matmul %7, %8, %cst_8 {dimension_numbers = #tpu.dot_dimension_numbers<[1], [0], [0], [1], [0, 0, 1, 1], [], []>} : vector<104x128xf32>, vector<128x8xf32>, vector<104x8xf32> -> vector<104x8xf32>
    %c0_9 = arith.constant 0 : index
    %c0_10 = arith.constant 0 : index
    %10 = vector.load %arg5[%c0_9, %c0_10] : memref<1x8xf32, #tpu.memory_space<vmem>>, vector<1x8xf32>
    %11 = vector.broadcast %10 : vector<1x8xf32> to vector<104x8xf32>
    %12 = arith.addf %9, %11 : vector<104x8xf32>
    %cst_11 = arith.constant dense<0xFF800000> : vector<104xf32>
    %13 = vector.multi_reduction <maximumf>, %12, %cst_11 [1] : vector<104x8xf32> to vector<104xf32>
    %14 = vector.shape_cast %13 : vector<104xf32> to vector<104x1xf32>
    %15 = vector.broadcast %14 : vector<104x1xf32> to vector<104x8xf32>
    %16 = arith.subf %12, %15 : vector<104x8xf32>
    %17 = math.exp %16 : vector<104x8xf32>
    %cst_12 = arith.constant dense<0.000000e+00> : vector<104xf32>
    %18 = vector.multi_reduction <add>, %17, %cst_12 [1] : vector<104x8xf32> to vector<104xf32>
    %19 = vector.shape_cast %18 : vector<104xf32> to vector<104x1xf32>
    %20 = tpu.reciprocal %19 {approx = true} : vector<104x1xf32> -> vector<104x1xf32>
    %21 = arith.mulf %19, %20 : vector<104x1xf32>
    %cst_13 = arith.constant 2.000000e+00 : f32
    %22 = vector.broadcast %cst_13 : f32 to vector<104x1xf32>
    %23 = arith.subf %22, %21 : vector<104x1xf32>
    %24 = arith.mulf %20, %23 : vector<104x1xf32>
    %25 = vector.broadcast %24 : vector<104x1xf32> to vector<104x8xf32>
    %26 = arith.mulf %17, %25 : vector<104x8xf32>
    %c0_14 = arith.constant 0 : index
    %c0_15 = arith.constant 0 : index
    %27 = vector.load %arg6[%c0_14, %c0_15] : memref<104x8xf32, #tpu.memory_space<vmem>>, vector<104x8xf32>
    tpu.vector_store %arg6[%c0_14, %c0_15], %26 {strides = array<i32>} : memref<104x8xf32, #tpu.memory_space<vmem>>, vector<104x8xf32>,
    return
  }
  func.func @transform_0(%arg0: i32) -> (i32, i32) {
    %c0_i32 = arith.constant 0 : i32
    %c0_i32_0 = arith.constant 0 : i32
    return %arg0, %c0_i32 : i32, i32
  }
  func.func @transform_1(%arg0: i32) -> (i32, i32) {
    %c0_i32 = arith.constant 0 : i32
    %c0_i32_0 = arith.constant 0 : i32
    %c0_i32_1 = arith.constant 0 : i32
    return %c0_i32, %c0_i32_0 : i32, i32
  }
  func.func @transform_2(%arg0: i32) -> (i32, i32) {
    %c0_i32 = arith.constant 0 : i32
    %c0_i32_0 = arith.constant 0 : i32
    %c0_i32_1 = arith.constant 0 : i32
    return %c0_i32, %c0_i32_0 : i32, i32
  }
  func.func @transform_3(%arg0: i32) -> (i32, i32) {
    %c0_i32 = arith.constant 0 : i32
    %c0_i32_0 = arith.constant 0 : i32
    %c0_i32_1 = arith.constant 0 : i32
    return %c0_i32, %c0_i32_0 : i32, i32
  }
  func.func @transform_4(%arg0: i32) -> (i32, i32) {
    %c0_i32 = arith.constant 0 : i32
    %c0_i32_0 = arith.constant 0 : i32
    %c0_i32_1 = arith.constant 0 : i32
    return %c0_i32, %c0_i32_0 : i32, i32
  }
  func.func @transform_5(%arg0: i32) -> (i32, i32) {
    %c0_i32 = arith.constant 0 : i32
    %c0_i32_0 = arith.constant 0 : i32
    return %arg0, %c0_i32 : i32, i32
  }
}

</mosaic_0001>

<llo_original>
// kernel: tpu_custom_call.1
$region0: #{tpu_custom_call.1}
  #allocation0 [shape = 'u32[]', space=smem, size = 0x4, offset = 0x4, fixed_abs, tag = 'smem constant byte address 0x4 - core index']
  #allocation1 [shape = 'u32[144,128]{1,0:T(1,128)}', space=vmem, size = 0x12000, scoped, tag = 'internal scratch']
  %s0 = inlined_call_operand.vmem [shape: f32[208,16], index: 0, kind: input, shape index: {}]
  %s1 = inlined_call_operand.vmem [shape: f32[16,128], index: 1, kind: input, shape index: {}]
  %s2 = inlined_call_operand.vmem [shape: f32[1,128], index: 2, kind: input, shape index: {}]
  %s3 = inlined_call_operand.vmem [shape: f32[128,8], index: 3, kind: input, shape index: {}]
  %s4 = inlined_call_operand.vmem [shape: f32[1,8], index: 4, kind: input, shape index: {}]
  %s5 = inlined_call_operand.vmem [shape: f32[208,8], index: 5, kind: output, shape index: {}]
  %s6 = sld [smem:[#allocation0]]
  $region53: #{tpu_custom_call.1} parent=0
    _
  %s8 = ssub.s32 1, %s6
  %s9 = scalar_select 0, %s8, %s6
  loop: start=0, step=1, limit=4
  $region2: #{tpu_custom_call.1} parent=0 // loop_pre_header
    _
  $region3: #{tpu_custom_call.1} parent=0 // loop_header
    %s11 = sphi 0, %s15
    %p12 = scmp.ge.s32.totalorder %s11, 4
    %s21 = sphi 0, %s23
    %s24 = sphi 0, %s21
    %s25 = sphi 0, %s24
    %s41 = sphi 0, %s25
    %s45 = sphi 0, %s45
    %s47 = sphi 0, %s45
    %s48 = sphi 0, %s47
    %s62 = sphi 0, %s48
    %s66 = sphi 0, %s66
    %s68 = sphi 0, %s66
    %s69 = sphi 0, %s68
    %s83 = sphi 0, %s69
    %s87 = sphi 0, %s87
    %s89 = sphi 0, %s87
    %s90 = sphi 0, %s89
    %s104 = sphi 0, %s90
    %s108 = sphi 0, %s108
    %s110 = sphi 0, %s108
    %s111 = sphi 0, %s110
    %s125 = sphi 0, %s111
    %s131 = sphi 0, %s133
    %s134 = sphi 0, %s131
    %s135 = sphi 0, %s134
    %s151 = sphi 0, %s135
  $region4: #{tpu_custom_call.1} parent=0 // loop_header_branch
    %14 = sbr.rel (%p12) target = $region8
  $region5: #{tpu_custom_call.1} parent=0 // loop_body
    %s16 = ssub.s32 %s11, 1
    %s17 = ssub.s32 %s11, 2
    %s18 = sadd.s32 %s11, 1
    %s19 = ssub.s32 %s11, %s18
    %p20 = scmp.eq.s32.totalorder %s19, 0
    %s22 = sadd.s32 %s21, 1
    %s23 = scalar_select %p20, %s21, %s22
    %p26 = pneg %p20
    %p27 = scmp.eq.s32.totalorder %s11, 1
    %p28 = por %p26, %p27
    %p29 = scmp.ne.s32.totalorder %s21, %s24
    %p30 = scmp.eq.s32.totalorder %s11, 0
    %p31 = por %p29, %p30
    %p32 = scmp.ne.s32.totalorder %s21, %s24
    %p33 = scmp.eq.s32.totalorder %s16, 1
    %p34 = por %p32, %p33
    %p35 = scmp.ne.s32.totalorder %s24, %s25
    %p36 = scmp.eq.s32.totalorder %s16, 0
    %p37 = por %p35, %p36
    %p38 = scmp.ne.s32.totalorder %s24, %s25
    %p39 = scmp.eq.s32.totalorder %s17, 1
    %p40 = por %p38, %p39
    %p42 = scmp.ne.s32.totalorder %s25, %s41
    %p43 = scmp.eq.s32.totalorder %s17, 0
    %p44 = por %p42, %p43
    %s46 = sadd.s32 %s45, 1
    %p49 = scmp.eq.s32.totalorder %s11, 1
    %p50 = scmp.ne.s32.totalorder %s45, %s47
    %p51 = scmp.eq.s32.totalorder %s11, 0
    %p52 = por %p50, %p51
    %p53 = scmp.ne.s32.totalorder %s45, %s47
    %p54 = scmp.eq.s32.totalorder %s16, 1
    %p55 = por %p53, %p54
    %p56 = scmp.ne.s32.totalorder %s47, %s48
    %p57 = scmp.eq.s32.totalorder %s16, 0
    %p58 = por %p56, %p57
    %p59 = scmp.ne.s32.totalorder %s47, %s48
    %p60 = scmp.eq.s32.totalorder %s17, 1
    %p61 = por %p59, %p60
    %p63 = scmp.ne.s32.totalorder %s48, %s62
    %p64 = scmp.eq.s32.totalorder %s17, 0
    %p65 = por %p63, %p64
    %s67 = sadd.s32 %s66, 1
    %p70 = scmp.eq.s32.totalorder %s11, 1
    %p71 = scmp.ne.s32.totalorder %s66, %s68
    %p72 = scmp.eq.s32.totalorder %s11, 0
    %p73 = por %p71, %p72
    %p74 = scmp.ne.s32.totalorder %s66, %s68
    %p75 = scmp.eq.s32.totalorder %s16, 1
    %p76 = por %p74, %p75
    %p77 = scmp.ne.s32.totalorder %s68, %s69
    %p78 = scmp.eq.s32.totalorder %s16, 0
    %p79 = por %p77, %p78
    %p80 = scmp.ne.s32.totalorder %s68, %s69
    %p81 = scmp.eq.s32.totalorder %s17, 1
    %p82 = por %p80, %p81
    %p84 = scmp.ne.s32.totalorder %s69, %s83
    %p85 = scmp.eq.s32.totalorder %s17, 0
    %p86 = por %p84, %p85
    %s88 = sadd.s32 %s87, 1
    %p91 = scmp.eq.s32.totalorder %s11, 1
    %p92 = scmp.ne.s32.totalorder %s87, %s89
    %p93 = scmp.eq.s32.totalorder %s11, 0
    %p94 = por %p92, %p93
    %p95 = scmp.ne.s32.totalorder %s87, %s89
    %p96 = scmp.eq.s32.totalorder %s16, 1
    %p97 = por %p95, %p96
    %p98 = scmp.ne.s32.totalorder %s89, %s90
    %p99 = scmp.eq.s32.totalorder %s16, 0
    %p100 = por %p98, %p99
    %p101 = scmp.ne.s32.totalorder %s89, %s90
    %p102 = scmp.eq.s32.totalorder %s17, 1
    %p103 = por %p101, %p102
    %p105 = scmp.ne.s32.totalorder %s90, %s104
    %p106 = scmp.eq.s32.totalorder %s17, 0
    %p107 = por %p105, %p106
    %s109 = sadd.s32 %s108, 1
    %p112 = scmp.eq.s32.totalorder %s11, 1
    %p113 = scmp.ne.s32.totalorder %s108, %s110
    %p114 = scmp.eq.s32.totalorder %s11, 0
    %p115 = por %p113, %p114
    %p116 = scmp.ne.s32.totalorder %s108, %s110
    %p117 = scmp.eq.s32.totalorder %s16, 1
    %p118 = por %p116, %p117
    %p119 = scmp.ne.s32.totalorder %s110, %s111
    %p120 = scmp.eq.s32.totalorder %s16, 0
    %p121 = por %p119, %p120
    %p122 = scmp.ne.s32.totalorder %s110, %s111
    %p123 = scmp.eq.s32.totalorder %s17, 1
    %p124 = por %p122, %p123
    %p126 = scmp.ne.s32.totalorder %s111, %s125
    %p127 = scmp.eq.s32.totalorder %s17, 0
    %p128 = por %p126, %p127
    %s129 = ssub.s32 %s11, %s18
    %p130 = scmp.eq.s32.totalorder %s129, 0
    %s132 = sadd.s32 %s131, 1
    %s133 = scalar_select %p130, %s131, %s132
    %p136 = pneg %p130
    %p137 = scmp.eq.s32.totalorder %s11, 1
    %p138 = por %p136, %p137
    %p139 = scmp.ne.s32.totalorder %s131, %s134
    %p140 = scmp.eq.s32.totalorder %s11, 0
    %p141 = por %p139, %p140
    %p142 = scmp.ne.s32.totalorder %s131, %s134
    %p143 = scmp.eq.s32.totalorder %s16, 1
    %p144 = por %p142, %p143
    %p145 = scmp.ne.s32.totalorder %s134, %s135
    %p146 = scmp.eq.s32.totalorder %s16, 0
    %p147 = por %p145, %p146
    %p148 = scmp.ne.s32.totalorder %s134, %s135
    %p149 = scmp.eq.s32.totalorder %s17, 1
    %p150 = por %p148, %p149
    %p152 = scmp.ne.s32.totalorder %s135, %s151
    %p153 = scmp.eq.s32.totalorder %s17, 0
    %p154 = por %p152, %p153
    %p155 = scmp.le.s32.totalorder 1, %s11
    %p156 = scmp.lt.s32.totalorder %s11, 3
    %p157 = pnand %p155, %p156
    %p158 = pneg %p157
    // Predicated region
    $region9: #{tpu_custom_call.1} parent=5 // pred_check
      _
    $region10: #{tpu_custom_call.1} parent=5 // pred_check_branch
      %160 = sbr.rel (%p157) target = $region12
    $region11: #{tpu_custom_call.1} parent=5 // pred_region
      %s161 = ssub.s32 %s11, 1
      // Predicated region
      $region13: #{tpu_custom_call.1} parent=11 // pred_check
        %p162 = pneg %p58
      $region14: #{tpu_custom_call.1} parent=11 // pred_check_branch
        %164 = sbr.rel (%p162) target = $region16
      $region15: #{tpu_custom_call.1} parent=11 // pred_region
        _
      $region16: #{tpu_custom_call.1} parent=11 // pred_fallthru
        _
      // Predicated region
      $region17: #{tpu_custom_call.1} parent=11 // pred_check
        %p165 = pneg %p79
      $region18: #{tpu_custom_call.1} parent=11 // pred_check_branch
        %167 = sbr.rel (%p165) target = $region20
      $region19: #{tpu_custom_call.1} parent=11 // pred_region
        _
      $region20: #{tpu_custom_call.1} parent=11 // pred_fallthru
        _
      // Predicated region
      $region21: #{tpu_custom_call.1} parent=11 // pred_check
        %p168 = pneg %p100
      $region22: #{tpu_custom_call.1} parent=11 // pred_check_branch
        %170 = sbr.rel (%p168) target = $region24
      $region23: #{tpu_custom_call.1} parent=11 // pred_region
        _
      $region24: #{tpu_custom_call.1} parent=11 // pred_fallthru
        _
      // Predicated region
      $region25: #{tpu_custom_call.1} parent=11 // pred_check
        %p171 = pneg %p121
      $region26: #{tpu_custom_call.1} parent=11 // pred_check_branch
        %173 = sbr.rel (%p171) target = $region28
      $region27: #{tpu_custom_call.1} parent=11 // pred_region
        _
      $region28: #{tpu_custom_call.1} parent=11 // pred_fallthru
        _
    $region12: #{tpu_custom_call.1} parent=5 // pred_fallthru
      _
    %p174 = scmp.lt.s32.totalorder %s11, 2
    // Predicated region
    $region29: #{tpu_custom_call.1} parent=5 // pred_check
      %p175 = pneg %p174
    $region30: #{tpu_custom_call.1} parent=5 // pred_check_branch
      %177 = sbr.rel (%p175) target = $region32
    $region31: #{tpu_custom_call.1} parent=5 // pred_region
      // Predicated region
      $region33: #{tpu_custom_call.1} parent=31 // pred_check
        %p178 = pneg %p31
      $region34: #{tpu_custom_call.1} parent=31 // pred_check_branch
        %180 = sbr.rel (%p178) target = $region36
      $region35: #{tpu_custom_call.1} parent=31 // pred_region
        %s181 = smul.u32 13, %s11
        %p182 = scmp.lt.s32.totalorder %s181, 25
        %s183 = scalar_select %p182, %s181, 25
        %s184 = smul.addr %s183, 8
        %s185 = scalar_lea.vmem %s0, %s184
        %s186 = smul.u32 13, %s11
      $region36: #{tpu_custom_call.1} parent=31 // pred_fallthru
        _
    $region32: #{tpu_custom_call.1} parent=5 // pred_fallthru
      _
    %p187 = scmp.le.s32.totalorder 1, %s11
    %p188 = scmp.lt.s32.totalorder %s11, 3
    %p189 = pnand %p187, %p188
    %p190 = pneg %p189
    // Predicated region
    $region37: #{tpu_custom_call.1} parent=5 // pred_check
      _
    $region38: #{tpu_custom_call.1} parent=5 // pred_check_branch
      %192 = sbr.rel (%p189) target = $region40
    $region39: #{tpu_custom_call.1} parent=5 // pred_region
      %s193 = ssub.s32 %s11, 1
      %s194 = smul.u32 13, %s16
      %p195 = scmp.lt.s32.totalorder %s194, 25
      %s196 = scalar_select %p195, %s194, 25
      %s197 = smul.addr %s196, 8
      %s198 = scalar_lea.vmem %s0, %s197
      %p199 = pneg %p37
      %p200 = pneg %p34
      %p201 = pneg %p58
      %p202 = pneg %p55
      %p203 = pneg %p79
      %p204 = pneg %p76
      %p205 = pneg %p100
      %p206 = pneg %p97
      %p207 = pneg %p121
      %p208 = pneg %p118
      %p209 = pneg %p147
      %p210 = pneg %p144
      %s211 = smul.u32 13, %s16
      %p212 = scmp.lt.s32.totalorder %s211, 25
      %s213 = scalar_select %p212, %s211, 25
      %s214 = smul.addr %s213, 8
      %s215 = scalar_lea.vmem %s5, %s214
      %s216 = smul.u32 13, %s16
      %p217 = scmp.lt.s32.totalorder %s216, 25
      %s218 = scalar_select %p217, %s216, 25
      %s219 = smul.addr %s218, 8
      %s220 = scalar_lea.vmem %s0, %s219
      %s221 = smul.u32 13, %s16
      %s222 = smul.u32 13, %s16
      %p223 = scmp.lt.s32.totalorder %s222, 25
      %s224 = scalar_select %p223, %s222, 25
      %s225 = smul.addr %s224, 8
      %s226 = scalar_lea.vmem %s5, %s225
      %s227 = smul.u32 13, %s16
      %v228 = vld [vmem:[%s220] sm:$0xff]
      %v229 = vld [vmem:[%s220 + $0x8] sm:$0xff]
      %v230 = vld [vmem:[%s220 + $0x10] sm:$0xff]
      %v231 = vld [vmem:[%s220 + $0x18] sm:$0xff]
      %v232 = vld [vmem:[%s220 + $0x20] sm:$0xff]
      %v233 = vld [vmem:[%s220 + $0x28] sm:$0xff]
      %v234 = vld [vmem:[%s220 + $0x30] sm:$0xff]
      %v235 = vld [vmem:[%s220 + $0x38] sm:$0xff]
      %v236 = vld [vmem:[%s220 + $0x40] sm:$0xff]
      %v237 = vld [vmem:[%s220 + $0x48] sm:$0xff]
      %v238 = vld [vmem:[%s220 + $0x50] sm:$0xff]
      %v239 = vld [vmem:[%s220 + $0x58] sm:$0xff]
      %v240 = vld [vmem:[%s220 + $0x60] sm:$0xff]
      %v241 = vld [vmem:[%s1] sm:$0xff]
      %v242 = vld [vmem:[%s1 + $0x8] sm:$0xff]
      %v243 = vld [vmem:[%s2] sm:$0x1]
      %v245 = vlaneseq
      %v246 = vshrl.u32 %v245, 7
      %v247 = vsub.s32 0, %v246
      %v248 = vrot.slane %v243, %v247
      %vm250 = vcmask 130048
      %v252 = vsel %vm250, %v228, 0
      %v255 = vsel %vm250, %v229, 0
      %v258 = vsel %vm250, %v230, 0
      %v261 = vsel %vm250, %v231, 0
      %v264 = vsel %vm250, %v232, 0
      %v267 = vsel %vm250, %v233, 0
      %v270 = vsel %vm250, %v234, 0
      %v273 = vsel %vm250, %v235, 0
      %v276 = vsel %vm250, %v236, 0
      %v279 = vsel %vm250, %v237, 0
      %v282 = vsel %vm250, %v238, 0
      %v285 = vsel %vm250, %v239, 0
      %v288 = vsel %vm250, %v240, 0
      %290 = vmatprep.subr.mxu0 0.0
      %291 = vmatpush1.msra.mxu0 0.0
      %292 = vmatprep.subr.mxu0 0.0
      %293 = vmatpush1.msra.mxu0 0.0
      %294 = vmatprep.subr.mxu0 0.0
      %295 = vmatpush1.msra.mxu0 0.0
      %296 = vmatprep.subr.mxu0 0.0
      %297 = vmatpush1.msra.mxu0 0.0
      %298 = vmatprep.subr.mxu0 0.0
      %299 = vmatpush1.msra.mxu0 0.0
      %300 = vmatprep.subr.mxu0 0.0
      %301 = vmatpush1.msra.mxu0 0.0
      %302 = vmatprep.subr.mxu0 0.0
      %303 = vmatpush1.msra.mxu0 0.0
      %304 = vmatprep.subr.mxu0 0.0
      %305 = vmatpush1.msra.mxu0 0.0
      %306 = vmatprep.subr.mxu0 0.0
      %307 = vmatpush1.msra.mxu0 0.0
      %308 = vmatprep.subr.mxu0 0.0
      %309 = vmatpush1.msra.mxu0 0.0
      %310 = vmatprep.subr.mxu0 0.0
      %311 = vmatpush1.msra.mxu0 0.0
      %312 = vmatprep.subr.mxu0 0.0
      %313 = vmatpush1.msra.mxu0 0.0
      %314 = vmatprep.subr.mxu0 0.0
      %315 = vmatpush1.msra.mxu0 0.0
      %316 = vmatprep.subr.mxu0 0.0
      %317 = vmatpush1.msra.mxu0 0.0
      %318 = vmatprep.subr.mxu0 0.0
      %319 = vmatpush1.msra.mxu0 %v242
      %320 = vmatprep.subr.mxu0 0.0
      %321 = vmatpush1.msra.mxu0 %v241
      %322 = vmatprep.subr.mxu0 0.0
      %323 = vmatpush2.msra.mxu0 0.0
      %324 = vmatprep.subr.mxu0 0.0
      %325 = vmatpush2.msra.mxu0 0.0
      %326 = vmatprep.subr.mxu0 0.0
      %327 = vmatpush2.msra.mxu0 0.0
      %328 = vmatprep.subr.mxu0 0.0
      %329 = vmatpush2.msra.mxu0 0.0
      %330 = vmatprep.subr.mxu0 0.0
      %331 = vmatpush2.msra.mxu0 0.0
      %332 = vmatprep.subr.mxu0 0.0
      %333 = vmatpush2.msra.mxu0 0.0
      %334 = vmatprep.subr.mxu0 0.0
      %335 = vmatpush2.msra.mxu0 0.0
      %336 = vmatprep.subr.mxu0 0.0
      %337 = vmatpush2.msra.mxu0 0.0
      %338 = vmatprep.subr.mxu0 0.0
      %339 = vmatpush2.msra.mxu0 0.0
      %340 = vmatprep.subr.mxu0 0.0
      %341 = vmatpush2.msra.mxu0 0.0
      %342 = vmatprep.subr.mxu0 0.0
      %343 = vmatpush2.msra.mxu0 0.0
      %344 = vmatprep.subr.mxu0 0.0
      %345 = vmatpush2.msra.mxu0 0.0
      %346 = vmatprep.subr.mxu0 0.0
      %347 = vmatpush2.msra.mxu0 0.0
      %348 = vmatprep.subr.mxu0 0.0
      %349 = vmatpush2.msra.mxu0 0.0
      %350 = vmatprep.subr.mxu0 0.0
      %351 = vmatpush2.msra.mxu0 0.0
      %352 = vmatprep.subr.mxu0 0.0
      %353 = vmatpush2.msra.mxu0 0.0
      %354 = vmatprep.mubr.f32.mxu0 0.0
      %355 = vmatmul.mubr.f32.gmra.mxu0 %v252
      %v356 = vpop.f32.mrf.mxu0
      %v357 = vadd.f32 %v248, %v356
      %v358 = vpop.f32.mrf.mxu0
      %359 = vmatprep.mubr.f32.mxu0 0.0
      %360 = vmatmul.mubr.f32.gmra.mxu0 %v255
      %v361 = vpop.f32.mrf.mxu0
      %v362 = vadd.f32 %v248, %v361
      %v363 = vpop.f32.mrf.mxu0
      %364 = vmatprep.mubr.f32.mxu0 0.0
      %365 = vmatmul.mubr.f32.gmra.mxu0 %v258
      %v366 = vpop.f32.mrf.mxu0
      %v367 = vadd.f32 %v248, %v366
      %v368 = vpop.f32.mrf.mxu0
      %369 = vmatprep.mubr.f32.mxu0 0.0
      %370 = vmatmul.mubr.f32.gmra.mxu0 %v261
      %v371 = vpop.f32.mrf.mxu0
      %v372 = vadd.f32 %v248, %v371
      %v373 = vpop.f32.mrf.mxu0
      %374 = vmatprep.mubr.f32.mxu0 0.0
      %375 = vmatmul.mubr.f32.gmra.mxu0 %v264
      %v376 = vpop.f32.mrf.mxu0
      %v377 = vadd.f32 %v248, %v376
      %v378 = vpop.f32.mrf.mxu0
      %379 = vmatprep.mubr.f32.mxu0 0.0
      %380 = vmatmul.mubr.f32.gmra.mxu0 %v267
      %v381 = vpop.f32.mrf.mxu0
      %v382 = vadd.f32 %v248, %v381
      %v383 = vpop.f32.mrf.mxu0
      %384 = vmatprep.mubr.f32.mxu0 0.0
      %385 = vmatmul.mubr.f32.gmra.mxu0 %v270
      %v386 = vpop.f32.mrf.mxu0
      %v387 = vadd.f32 %v248, %v386
      %v388 = vpop.f32.mrf.mxu0
      %389 = vmatprep.mubr.f32.mxu0 0.0
      %390 = vmatmul.mubr.f32.gmra.mxu0 %v273
      %v391 = vpop.f32.mrf.mxu0
      %v392 = vadd.f32 %v248, %v391
      %v393 = vpop.f32.mrf.mxu0
      %394 = vmatprep.mubr.f32.mxu0 0.0
      %395 = vmatmul.mubr.f32.gmra.mxu0 %v276
      %v396 = vpop.f32.mrf.mxu0
      %v397 = vadd.f32 %v248, %v396
      %v398 = vpop.f32.mrf.mxu0
      %399 = vmatprep.mubr.f32.mxu0 0.0
      %400 = vmatmul.mubr.f32.gmra.mxu0 %v279
      %v401 = vpop.f32.mrf.mxu0
      %v402 = vadd.f32 %v248, %v401
      %v403 = vpop.f32.mrf.mxu0
      %404 = vmatprep.mubr.f32.mxu0 0.0
      %405 = vmatmul.mubr.f32.gmra.mxu0 %v282
      %v406 = vpop.f32.mrf.mxu0
      %v407 = vadd.f32 %v248, %v406
      %v408 = vpop.f32.mrf.mxu0
      %409 = vmatprep.mubr.f32.mxu0 0.0
      %410 = vmatmul.mubr.f32.gmra.mxu0 %v285
      %v411 = vpop.f32.mrf.mxu0
      %v412 = vadd.f32 %v248, %v411
      %v413 = vpop.f32.mrf.mxu0
      %414 = vmatprep.mubr.f32.mxu0 0.0
      %415 = vmatmul.mubr.f32.gmra.mxu0 %v288
      %v416 = vpop.f32.mrf.mxu0
      %v417 = vadd.f32 %v248, %v416
      %v418 = vpop.f32.mrf.mxu0
      %419 = vdwg.mxu0
      %v420 = vmax.f32 %v357, 0.0
      %v421 = vmax.f32 %v362, 0.0
      %v422 = vmax.f32 %v367, 0.0
      %v423 = vmax.f32 %v372, 0.0
      %v424 = vmax.f32 %v377, 0.0
      %v425 = vmax.f32 %v382, 0.0
      %v426 = vmax.f32 %v387, 0.0
      %v427 = vmax.f32 %v392, 0.0
      %v428 = vmax.f32 %v397, 0.0
      %v429 = vmax.f32 %v402, 0.0
      %v430 = vmax.f32 %v407, 0.0
      %v431 = vmax.f32 %v412, 0.0
      %v432 = vmax.f32 %v417, 0.0
      %v433 = vld [vmem:[%s3] sm:$0xff]
      %v434 = vld [vmem:[%s3 + $0x8] sm:$0xff]
      %v435 = vld [vmem:[%s3 + $0x10] sm:$0xff]
      %v436 = vld [vmem:[%s3 + $0x18] sm:$0xff]
      %v437 = vld [vmem:[%s3 + $0x20] sm:$0xff]
      %v438 = vld [vmem:[%s3 + $0x28] sm:$0xff]
      %v439 = vld [vmem:[%s3 + $0x30] sm:$0xff]
      %v440 = vld [vmem:[%s3 + $0x38] sm:$0xff]
      %v441 = vld [vmem:[%s3 + $0x40] sm:$0xff]
      %v442 = vld [vmem:[%s3 + $0x48] sm:$0xff]
      %v443 = vld [vmem:[%s3 + $0x50] sm:$0xff]
      %v444 = vld [vmem:[%s3 + $0x58] sm:$0xff]
      %v445 = vld [vmem:[%s3 + $0x60] sm:$0xff]
      %v446 = vld [vmem:[%s3 + $0x68] sm:$0xff]
      %v447 = vld [vmem:[%s3 + $0x70] sm:$0xff]
      %v448 = vld [vmem:[%s3 + $0x78] sm:$0xff]
      %v449 = vld [vmem:[%s4] sm:$0x1]
      %v451 = vlaneseq
      %v452 = vshrl.u32 %v451, 7
      %v453 = vsub.s32 0, %v452
      %v454 = vrot.slane %v449, %v453
      %456 = vmatprep.subr.mxu0 0.0
      %457 = vmatpush1.msra.mxu0 %v448
      %458 = vmatprep.subr.mxu0 0.0
      %459 = vmatpush1.msra.mxu0 %v447
      %460 = vmatprep.subr.mxu0 0.0
      %461 = vmatpush1.msra.mxu0 %v446
      %462 = vmatprep.subr.mxu0 0.0
      %463 = vmatpush1.msra.mxu0 %v445
      %464 = vmatprep.subr.mxu0 0.0
      %465 = vmatpush1.msra.mxu0 %v444
      %466 = vmatprep.subr.mxu0 0.0
      %467 = vmatpush1.msra.mxu0 %v443
      %468 = vmatprep.subr.mxu0 0.0
      %469 = vmatpush1.msra.mxu0 %v442
      %470 = vmatprep.subr.mxu0 0.0
      %471 = vmatpush1.msra.mxu0 %v441
      %472 = vmatprep.subr.mxu0 0.0
      %473 = vmatpush1.msra.mxu0 %v440
      %474 = vmatprep.subr.mxu0 0.0
      %475 = vmatpush1.msra.mxu0 %v439
      %476 = vmatprep.subr.mxu0 0.0
      %477 = vmatpush1.msra.mxu0 %v438
      %478 = vmatprep.subr.mxu0 0.0
      %479 = vmatpush1.msra.mxu0 %v437
      %480 = vmatprep.subr.mxu0 0.0
      %481 = vmatpush1.msra.mxu0 %v436
      %482 = vmatprep.subr.mxu0 0.0
      %483 = vmatpush1.msra.mxu0 %v435
      %484 = vmatprep.subr.mxu0 0.0
      %485 = vmatpush1.msra.mxu0 %v434
      %486 = vmatprep.subr.mxu0 0.0
      %487 = vmatpush1.msra.mxu0 %v433
      %488 = vmatprep.subr.mxu0 0.0
      %489 = vmatpush2.msra.mxu0 0.0
      %490 = vmatprep.subr.mxu0 0.0
      %491 = vmatpush2.msra.mxu0 0.0
      %492 = vmatprep.subr.mxu0 0.0
      %493 = vmatpush2.msra.mxu0 0.0
      %494 = vmatprep.subr.mxu0 0.0
      %495 = vmatpush2.msra.mxu0 0.0
      %496 = vmatprep.subr.mxu0 0.0
      %497 = vmatpush2.msra.mxu0 0.0
      %498 = vmatprep.subr.mxu0 0.0
      %499 = vmatpush2.msra.mxu0 0.0
      %500 = vmatprep.subr.mxu0 0.0
      %501 = vmatpush2.msra.mxu0 0.0
      %502 = vmatprep.subr.mxu0 0.0
      %503 = vmatpush2.msra.mxu0 0.0
      %504 = vmatprep.subr.mxu0 0.0
      %505 = vmatpush2.msra.mxu0 0.0
      %506 = vmatprep.subr.mxu0 0.0
      %507 = vmatpush2.msra.mxu0 0.0
      %508 = vmatprep.subr.mxu0 0.0
      %509 = vmatpush2.msra.mxu0 0.0
      %510 = vmatprep.subr.mxu0 0.0
      %511 = vmatpush2.msra.mxu0 0.0
      %512 = vmatprep.subr.mxu0 0.0
      %513 = vmatpush2.msra.mxu0 0.0
      %514 = vmatprep.subr.mxu0 0.0
      %515 = vmatpush2.msra.mxu0 0.0
      %516 = vmatprep.subr.mxu0 0.0
      %517 = vmatpush2.msra.mxu0 0.0
      %518 = vmatprep.subr.mxu0 0.0
      %519 = vmatpush2.msra.mxu0 0.0
      %520 = vmatprep.mubr.f32.mxu0 0.0
      %521 = vmatmul.mubr.f32.gmra.mxu0 %v420
      %v522 = vpop.f32.mrf.mxu0
      %v523 = vadd.f32 %v454, %v522
      %v524 = vpop.f32.mrf.mxu0
      %525 = vmatprep.mubr.f32.mxu0 0.0
      %526 = vmatmul.mubr.f32.gmra.mxu0 %v421
      %v527 = vpop.f32.mrf.mxu0
      %v528 = vadd.f32 %v454, %v527
      %v529 = vpop.f32.mrf.mxu0
      %530 = vmatprep.mubr.f32.mxu0 0.0
      %531 = vmatmul.mubr.f32.gmra.mxu0 %v422
      %v532 = vpop.f32.mrf.mxu0
      %v533 = vadd.f32 %v454, %v532
      %v534 = vpop.f32.mrf.mxu0
      %535 = vmatprep.mubr.f32.mxu0 0.0
      %536 = vmatmul.mubr.f32.gmra.mxu0 %v423
      %v537 = vpop.f32.mrf.mxu0
      %v538 = vadd.f32 %v454, %v537
      %v539 = vpop.f32.mrf.mxu0
      %540 = vmatprep.mubr.f32.mxu0 0.0
      %541 = vmatmul.mubr.f32.gmra.mxu0 %v424
      %v542 = vpop.f32.mrf.mxu0
      %v543 = vadd.f32 %v454, %v542
      %v544 = vpop.f32.mrf.mxu0
      %545 = vmatprep.mubr.f32.mxu0 0.0
      %546 = vmatmul.mubr.f32.gmra.mxu0 %v425
      %v547 = vpop.f32.mrf.mxu0
      %v548 = vadd.f32 %v454, %v547
      %v549 = vpop.f32.mrf.mxu0
      %550 = vmatprep.mubr.f32.mxu0 0.0
      %551 = vmatmul.mubr.f32.gmra.mxu0 %v426
      %v552 = vpop.f32.mrf.mxu0
      %v553 = vadd.f32 %v454, %v552
      %v554 = vpop.f32.mrf.mxu0
      %555 = vmatprep.mubr.f32.mxu0 0.0
      %556 = vmatmul.mubr.f32.gmra.mxu0 %v427
      %v557 = vpop.f32.mrf.mxu0
      %v558 = vadd.f32 %v454, %v557
      %v559 = vpop.f32.mrf.mxu0
      %560 = vmatprep.mubr.f32.mxu0 0.0
      %561 = vmatmul.mubr.f32.gmra.mxu0 %v428
      %v562 = vpop.f32.mrf.mxu0
      %v563 = vadd.f32 %v454, %v562
      %v564 = vpop.f32.mrf.mxu0
      %565 = vmatprep.mubr.f32.mxu0 0.0
      %566 = vmatmul.mubr.f32.gmra.mxu0 %v429
      %v567 = vpop.f32.mrf.mxu0
      %v568 = vadd.f32 %v454, %v567
      %v569 = vpop.f32.mrf.mxu0
      %570 = vmatprep.mubr.f32.mxu0 0.0
      %571 = vmatmul.mubr.f32.gmra.mxu0 %v430
      %v572 = vpop.f32.mrf.mxu0
      %v573 = vadd.f32 %v454, %v572
      %v574 = vpop.f32.mrf.mxu0
      %575 = vmatprep.mubr.f32.mxu0 0.0
      %576 = vmatmul.mubr.f32.gmra.mxu0 %v431
      %v577 = vpop.f32.mrf.mxu0
      %v578 = vadd.f32 %v454, %v577
      %v579 = vpop.f32.mrf.mxu0
      %580 = vmatprep.mubr.f32.mxu0 0.0
      %581 = vmatmul.mubr.f32.gmra.mxu0 %v432
      %v582 = vpop.f32.mrf.mxu0
      %v583 = vadd.f32 %v454, %v582
      %v584 = vpop.f32.mrf.mxu0
      %585 = vdwg.mxu0
      %vm586 = vcmask 64512
      %v587 = vsel %vm586, %v523, -inf
      %588 = vmax.xlane.f32.xlu0 %v587
      %v589 = vpop.xlane.xlu0 %588
      %v590 = vsel %vm586, %v528, -inf
      %591 = vmax.xlane.f32.xlu0 %v590
      %v592 = vpop.xlane.xlu0 %591
      %v593 = vsel %vm586, %v533, -inf
      %594 = vmax.xlane.f32.xlu0 %v593
      %v595 = vpop.xlane.xlu0 %594
      %v596 = vsel %vm586, %v538, -inf
      %597 = vmax.xlane.f32.xlu0 %v596
      %v598 = vpop.xlane.xlu0 %597
      %v599 = vsel %vm586, %v543, -inf
      %600 = vmax.xlane.f32.xlu0 %v599
      %v601 = vpop.xlane.xlu0 %600
      %v602 = vsel %vm586, %v548, -inf
      %603 = vmax.xlane.f32.xlu0 %v602
      %v604 = vpop.xlane.xlu0 %603
      %v605 = vsel %vm586, %v553, -inf
      %606 = vmax.xlane.f32.xlu0 %v605
      %v607 = vpop.xlane.xlu0 %606
      %v608 = vsel %vm586, %v558, -inf
      %609 = vmax.xlane.f32.xlu0 %v608
      %v610 = vpop.xlane.xlu0 %609
      %v611 = vsel %vm586, %v563, -inf
      %612 = vmax.xlane.f32.xlu0 %v611
      %v613 = vpop.xlane.xlu0 %612
      %v614 = vsel %vm586, %v568, -inf
      %615 = vmax.xlane.f32.xlu0 %v614
      %v616 = vpop.xlane.xlu0 %615
      %v617 = vsel %vm586, %v573, -inf
      %618 = vmax.xlane.f32.xlu0 %v617
      %v619 = vpop.xlane.xlu0 %618
      %v620 = vsel %vm586, %v578, -inf
      %621 = vmax.xlane.f32.xlu0 %v620
      %v622 = vpop.xlane.xlu0 %621
      %v623 = vsel %vm586, %v583, -inf
      %624 = vmax.xlane.f32.xlu0 %v623
      %v625 = vpop.xlane.xlu0 %624
      %v626 = vsub.f32 %v523, %v589
      %v627 = vsub.f32 %v528, %v592
      %v628 = vsub.f32 %v533, %v595
      %v629 = vsub.f32 %v538, %v598
      %v630 = vsub.f32 %v543, %v601
      %v631 = vsub.f32 %v548, %v604
      %v632 = vsub.f32 %v553, %v607
      %v633 = vsub.f32 %v558, %v610
      %v634 = vsub.f32 %v563, %v613
      %v635 = vsub.f32 %v568, %v616
      %v636 = vsub.f32 %v573, %v619
      %v637 = vsub.f32 %v578, %v622
      %v638 = vsub.f32 %v583, %v625
      %v639 = vmul.f32 %v626, 1.442695
      %v640 = vpow.pop %v639
      %v641 = vmul.f32 %v627, 1.442695
      %v642 = vpow.pop %v641
      %v643 = vmul.f32 %v628, 1.442695
      %v644 = vpow.pop %v643
      %v645 = vmul.f32 %v629, 1.442695
      %v646 = vpow.pop %v645
      %v647 = vmul.f32 %v630, 1.442695
      %v648 = vpow.pop %v647
      %v649 = vmul.f32 %v631, 1.442695
      %v650 = vpow.pop %v649
      %v651 = vmul.f32 %v632, 1.442695
      %v652 = vpow.pop %v651
      %v653 = vmul.f32 %v633, 1.442695
      %v654 = vpow.pop %v653
      %v655 = vmul.f32 %v634, 1.442695
      %v656 = vpow.pop %v655
      %v657 = vmul.f32 %v635, 1.442695
      %v658 = vpow.pop %v657
      %v659 = vmul.f32 %v636, 1.442695
      %v660 = vpow.pop %v659
      %v661 = vmul.f32 %v637, 1.442695
      %v662 = vpow.pop %v661
      %v663 = vmul.f32 %v638, 1.442695
      %v664 = vpow.pop %v663
      %v665 = vsel %vm586, %v640, 0.0
      %666 = vadd.xlane.f32.xlu0 %v665
      %v667 = vpop.xlane.xlu0 %666
      %v668 = vsel %vm586, %v642, 0.0
      %669 = vadd.xlane.f32.xlu0 %v668
      %v670 = vpop.xlane.xlu0 %669
      %v671 = vsel %vm586, %v644, 0.0
      %672 = vadd.xlane.f32.xlu0 %v671
      %v673 = vpop.xlane.xlu0 %672
      %v674 = vsel %vm586, %v646, 0.0
      %675 = vadd.xlane.f32.xlu0 %v674
      %v676 = vpop.xlane.xlu0 %675
      %v677 = vsel %vm586, %v648, 0.0
      %678 = vadd.xlane.f32.xlu0 %v677
      %v679 = vpop.xlane.xlu0 %678
      %v680 = vsel %vm586, %v650, 0.0
      %681 = vadd.xlane.f32.xlu0 %v680
      %v682 = vpop.xlane.xlu0 %681
      %v683 = vsel %vm586, %v652, 0.0
      %684 = vadd.xlane.f32.xlu0 %v683
      %v685 = vpop.xlane.xlu0 %684
      %v686 = vsel %vm586, %v654, 0.0
      %687 = vadd.xlane.f32.xlu0 %v686
      %v688 = vpop.xlane.xlu0 %687
      %v689 = vsel %vm586, %v656, 0.0
      %690 = vadd.xlane.f32.xlu0 %v689
      %v691 = vpop.xlane.xlu0 %690
      %v692 = vsel %vm586, %v658, 0.0
      %693 = vadd.xlane.f32.xlu0 %v692
      %v694 = vpop.xlane.xlu0 %693
      %v695 = vsel %vm586, %v660, 0.0
      %696 = vadd.xlane.f32.xlu0 %v695
      %v697 = vpop.xlane.xlu0 %696
      %v698 = vsel %vm586, %v662, 0.0
      %699 = vadd.xlane.f32.xlu0 %v698
      %v700 = vpop.xlane.xlu0 %699
      %v701 = vsel %vm586, %v664, 0.0
      %702 = vadd.xlane.f32.xlu0 %v701
      %v703 = vpop.xlane.xlu0 %702
      %v704 = vrcp.pop %v667
      %v705 = vrcp.pop %v670
      %v706 = vrcp.pop %v673
      %v707 = vrcp.pop %v676
      %v708 = vrcp.pop %v679
      %v709 = vrcp.pop %v682
      %v710 = vrcp.pop %v685
      %v711 = vrcp.pop %v688
      %v712 = vrcp.pop %v691
      %v713 = vrcp.pop %v694
      %v714 = vrcp.pop %v697
      %v715 = vrcp.pop %v700
      %v716 = vrcp.pop %v703
      %v717 = vmul.f32 %v667, %v704
      %v718 = vmul.f32 %v670, %v705
      %v719 = vmul.f32 %v673, %v706
      %v720 = vmul.f32 %v676, %v707
      %v721 = vmul.f32 %v679, %v708
      %v722 = vmul.f32 %v682, %v709
      %v723 = vmul.f32 %v685, %v710
      %v724 = vmul.f32 %v688, %v711
      %v725 = vmul.f32 %v691, %v712
      %v726 = vmul.f32 %v694, %v713
      %v727 = vmul.f32 %v697, %v714
      %v728 = vmul.f32 %v700, %v715
      %v729 = vmul.f32 %v703, %v716
      %v730 = vsub.f32 2.0, %v717
      %v731 = vsub.f32 2.0, %v718
      %v732 = vsub.f32 2.0, %v719
      %v733 = vsub.f32 2.0, %v720
      %v734 = vsub.f32 2.0, %v721
      %v735 = vsub.f32 2.0, %v722
      %v736 = vsub.f32 2.0, %v723
      %v737 = vsub.f32 2.0, %v724
      %v738 = vsub.f32 2.0, %v725
      %v739 = vsub.f32 2.0, %v726
      %v740 = vsub.f32 2.0, %v727
      %v741 = vsub.f32 2.0, %v728
      %v742 = vsub.f32 2.0, %v729
      %v743 = vmul.f32 %v704, %v730
      %v744 = vmul.f32 %v705, %v731
      %v745 = vmul.f32 %v706, %v732
      %v746 = vmul.f32 %v707, %v733
      %v747 = vmul.f32 %v708, %v734
      %v748 = vmul.f32 %v709, %v735
      %v749 = vmul.f32 %v710, %v736
      %v750 = vmul.f32 %v711, %v737
      %v751 = vmul.f32 %v712, %v738
      %v752 = vmul.f32 %v713, %v739
      %v753 = vmul.f32 %v714, %v740
      %v754 = vmul.f32 %v715, %v741
      %v755 = vmul.f32 %v716, %v742
      %v756 = vmul.f32 %v640, %v743
      %v757 = vmul.f32 %v642, %v744
      %v758 = vmul.f32 %v644, %v745
      %v759 = vmul.f32 %v646, %v746
      %v760 = vmul.f32 %v648, %v747
      %v761 = vmul.f32 %v650, %v748
      %v762 = vmul.f32 %v652, %v749
      %v763 = vmul.f32 %v654, %v750
      %v764 = vmul.f32 %v656, %v751
      %v765 = vmul.f32 %v658, %v752
      %v766 = vmul.f32 %v660, %v753
      %v767 = vmul.f32 %v662, %v754
      %v768 = vmul.f32 %v664, %v755
      %769 = vst.msk [vmem:[%s226] sm:$0xff] %vm586, %v756
      %770 = vst.msk [vmem:[%s226 + $0x8] sm:$0xff] %vm586, %v757
      %771 = vst.msk [vmem:[%s226 + $0x10] sm:$0xff] %vm586, %v758
      %772 = vst.msk [vmem:[%s226 + $0x18] sm:$0xff] %vm586, %v759
      %773 = vst.msk [vmem:[%s226 + $0x20] sm:$0xff] %vm586, %v760
      %774 = vst.msk [vmem:[%s226 + $0x28] sm:$0xff] %vm586, %v761
      %775 = vst.msk [vmem:[%s226 + $0x30] sm:$0xff] %vm586, %v762
      %776 = vst.msk [vmem:[%s226 + $0x38] sm:$0xff] %vm586, %v763
      %777 = vst.msk [vmem:[%s226 + $0x40] sm:$0xff] %vm586, %v764
      %778 = vst.msk [vmem:[%s226 + $0x48] sm:$0xff] %vm586, %v765
      %779 = vst.msk [vmem:[%s226 + $0x50] sm:$0xff] %vm586, %v766
      %780 = vst.msk [vmem:[%s226 + $0x58] sm:$0xff] %vm586, %v767
      %781 = vst.msk [vmem:[%s226 + $0x60] sm:$0xff] %vm586, %v768
      %s782 = smul.u32 13, %s16
      %p783 = scmp.lt.s32.totalorder %s782, 25
      %s784 = scalar_select %p783, %s782, 25
      %s785 = smul.addr %s784, 8
      %s786 = scalar_lea.vmem %s5, %s785
      // Predicated region
      $region41: #{tpu_custom_call.1} parent=39 // pred_check
        %p787 = pneg %p144
      $region42: #{tpu_custom_call.1} parent=39 // pred_check_branch
        %789 = sbr.rel (%p787) target = $region44
      $region43: #{tpu_custom_call.1} parent=39 // pred_region
        %s790 = smul.u32 13, %s16
      $region44: #{tpu_custom_call.1} parent=39 // pred_fallthru
        _
    $region40: #{tpu_custom_call.1} parent=5 // pred_fallthru
      _
    %p791 = scmp.le.s32.totalorder 2, %s11
    // Predicated region
    $region45: #{tpu_custom_call.1} parent=5 // pred_check
      %p792 = pneg %p791
    $region46: #{tpu_custom_call.1} parent=5 // pred_check_branch
      %794 = sbr.rel (%p792) target = $region48
    $region47: #{tpu_custom_call.1} parent=5 // pred_region
      %s795 = ssub.s32 %s11, 2
      // Predicated region
      $region49: #{tpu_custom_call.1} parent=47 // pred_check
        %p796 = pneg %p150
      $region50: #{tpu_custom_call.1} parent=47 // pred_check_branch
        %798 = sbr.rel (%p796) target = $region52
      $region51: #{tpu_custom_call.1} parent=47 // pred_region
        %s799 = smul.u32 13, %s17
        %p800 = scmp.lt.s32.totalorder %s799, 25
        %s801 = scalar_select %p800, %s799, 25
        %s802 = smul.addr %s801, 8
        %s803 = scalar_lea.vmem %s5, %s802
      $region52: #{tpu_custom_call.1} parent=47 // pred_fallthru
        _
    $region48: #{tpu_custom_call.1} parent=5 // pred_fallthru
      _
  $region6: #{tpu_custom_call.1} parent=0 // loop_footer
    %s15 = sadd.s32 1, %s11
  $region7: #{tpu_custom_call.1} parent=0 // loop_footer_branch
    %10 = sbr.rel target = $region3
  $region8: #{tpu_custom_call.1} parent=0 // loop_exit
    _

</llo_original>
